<compile_context>
chip_gen: v6e
topology: v6e:2x2x1
jax: 0.10.0
libtpu: 0.0.40
codegen_flags: <defaults>
</compile_context>

<pallas_src>
import functools

import jax
import jax.numpy as jnp
from jax import lax
from jax.experimental import pallas as pl
from jax.experimental.pallas import tpu as pltpu


# ---------------------------------------------------------------------------
# Pallas kernel A: pairwise squared distances   dist[p, n] = ||q_p - x_n||^2
# ---------------------------------------------------------------------------
def _sqdist_kernel(q_ref, x_ref, o_ref):
    q = q_ref[...]                                   # (P, 3)
    x = x_ref[...]                                   # (3, N)
    # 3-term contraction on the VPU: three outer-product accumulates, exact f32.
    s = q[:, 0:1] * x[0:1, :]
    s = s + q[:, 1:2] * x[1:2, :]
    s = s + q[:, 2:3] * x[2:3, :]
    qsq = jnp.sum(q * q, axis=1, keepdims=True)      # (P, 1)
    xsq = jnp.sum(x * x, axis=0, keepdims=True)      # (1, N)
    o_ref[...] = qsq + xsq - 2.0 * s


def pallas_square_distance(new_xyz, xyz):
    """new_xyz: (B, 3, P) query centroids, xyz: (B, 3, N) -> (B, P, N) f32."""
    B, _, P = new_xyz.shape
    N = xyz.shape[2]
    q = jnp.transpose(new_xyz, (0, 2, 1))            # (B, P, 3)
    return pl.pallas_call(
        _sqdist_kernel,
        out_shape=jax.ShapeDtypeStruct((B, P, N), jnp.float32),
        grid=(B,),
        in_specs=[
            pl.BlockSpec((pl.Squeezed(), P, 3), lambda b: (b, 0, 0)),
            pl.BlockSpec((pl.Squeezed(), 3, N), lambda b: (b, 0, 0)),
        ],
        out_specs=pl.BlockSpec((pl.Squeezed(), P, N), lambda b: (b, 0, 0)),
        compiler_params=pltpu.CompilerParams(dimension_semantics=("parallel",)),
        cost_estimate=pl.CostEstimate(
            flops=8 * B * P * N, transcendentals=0,
            bytes_accessed=4 * (B * P * 3 + B * 3 * N + B * P * N)),
    )(q, xyz)


# ---------------------------------------------------------------------------
# Pallas kernel B: fused shared-MLP (1x1 convs, BN pre-folded) + max over K
# ---------------------------------------------------------------------------
def _make_mlp_pool_kernel(n_layers, nsample, npoint):
    def kernel(x_ref, *refs):                        # refs = w0, b0, ..., o_ref
        o_ref = refs[-1]
        h = x_ref[...]                               # (C_in, nsample * npoint)
        for li in range(n_layers):
            w = refs[2 * li][...]                    # (C_out, C_in)
            b = refs[2 * li + 1][...]                # (C_out, 1)
            h = jnp.dot(w, h, preferred_element_type=jnp.float32) + b
            if li < n_layers - 1:                    # last layer: no activation
                h = jnp.maximum(h, 0.0)
        # Max over nsample: flattened spatial layout is [k * npoint + p], so
        # the reduction is (nsample-1) vector maxes over lane-aligned P slices.
        m = h[:, 0:npoint]
        for k in range(1, nsample):
            m = jnp.maximum(m, h[:, k * npoint:(k + 1) * npoint])
        o_ref[...] = m.astype(o_ref.dtype)
    return kernel


def pallas_mlp_maxpool(new_points, weights, biases):
    """new_points: (B, C_in, P, K); weights[i]: (Co_i, Ci_i); biases[i]: (Co_i, 1).
    Returns max_K MLP(new_points), shape (B, C_last, P)."""
    B, C_in, P, K = new_points.shape
    n_layers = len(weights)
    C_last = weights[-1].shape[0]

    # Lane-dense layout: spatial dim on lanes as [k * P + p] so matmuls see a
    # K*P-wide slab and the pooled output (last dim = P) gets full-width stores.
    x = jnp.transpose(new_points, (0, 1, 3, 2)).reshape(B, C_in, K * P)

    # Pad the (typically 3 + f) input-channel dim to a sublane multiple so the
    # first contraction runs over clean 8-row tiles; zero input rows times zero
    # weight columns leave the result unchanged.
    pad = (-C_in) % 8
    if pad:
        x = jnp.pad(x, ((0, 0), (0, pad), (0, 0)))
        weights = [jnp.pad(weights[0], ((0, 0), (0, pad)))] + list(weights[1:])
        C_in += pad

    w_specs = []
    for w, b in zip(weights, biases):
        w_specs.append(pl.BlockSpec(w.shape, lambda i: (0, 0)))   # grid-invariant
        w_specs.append(pl.BlockSpec(b.shape, lambda i: (0, 0)))

    flops = 2 * B * K * P * sum(int(w.shape[0]) * int(w.shape[1]) for w in weights)
    bytes_accessed = 4 * (int(x.size) + B * C_last * P
                          + sum(int(w.size) + int(b.size)
                                for w, b in zip(weights, biases)))

    return pl.pallas_call(
        _make_mlp_pool_kernel(n_layers, K, P),
        out_shape=jax.ShapeDtypeStruct((B, C_last, P), jnp.float32),
        grid=(B,),
        in_specs=[pl.BlockSpec((pl.Squeezed(), C_in, K * P),
                               lambda i: (i, 0, 0))] + w_specs,
        out_specs=pl.BlockSpec((pl.Squeezed(), C_last, P), lambda i: (i, 0, 0)),
        compiler_params=pltpu.CompilerParams(dimension_semantics=("parallel",)),
        cost_estimate=pl.CostEstimate(flops=flops, transcendentals=0,
                                      bytes_accessed=bytes_accessed),
    )(x, *[t for wb in zip(weights, biases) for t in wb])


# ---------------------------------------------------------------------------
# Host-side (plain JAX) sampling / grouping
# ---------------------------------------------------------------------------
def furthest_point_sample(xyz, npoint):
    """xyz: (B, 3, N) -> int32 (B, npoint) FPS indices (pointnet2 semantics)."""
    # TODO(synk): FPS is an inherently sequential data-dependent argmax loop; kept in plain JAX.
    pts = jnp.transpose(xyz, (0, 2, 1))              # (B, N, 3)

    def one(p):
        n = p.shape[0]

        def body(i, state):
            idxs, dists, far = state
            idxs = idxs.at[i].set(far)
            d = jnp.sum((p - p[far]) ** 2, axis=-1)
            dists = jnp.minimum(dists, d)
            return idxs, dists, jnp.argmax(dists).astype(jnp.int32)

        init = (jnp.zeros((npoint,), jnp.int32),
                jnp.full((n,), 1e10, jnp.float32),
                jnp.int32(0))
        return lax.fori_loop(0, npoint, body, init)[0]

    return jax.vmap(one)(pts)


def gather_points(points, idx):
    """points: (B, C, N), idx: (B, P) -> (B, C, P)   (== gather_operation)."""
    B, C, _ = points.shape
    P = idx.shape[1]
    return jnp.take_along_axis(
        points, jnp.broadcast_to(idx[:, None, :], (B, C, P)), axis=2)


def group_points(points, idx):
    """points: (B, C, N), idx: (B, P, K) -> (B, C, P, K) (== grouping_operation)."""
    B, C, _ = points.shape
    _, P, K = idx.shape
    flat = idx.reshape(B, 1, P * K)
    g = jnp.take_along_axis(points, jnp.broadcast_to(flat, (B, C, P * K)), axis=2)
    return g.reshape(B, C, P, K)


def query_knn(nsample, xyz, new_xyz, include_self=True):
    """xyz: (B, 3, N), new_xyz: (B, 3, P) -> int32 (B, P, nsample)."""
    pad = 0 if include_self else 1
    sqrdists = pallas_square_distance(new_xyz, xyz)          # Pallas kernel A
    # TODO(synk): torch.argsort / k-smallest selection has no clean Pallas equivalent; stays in XLA via lax.top_k.
    _, idx = lax.top_k(-sqrdists, nsample + pad)
    return idx[:, :, pad:nsample + pad].astype(jnp.int32)


def sample_and_group_knn(xyz, points, npoint, k, use_xyz=True, idx=None):
    new_xyz = gather_points(xyz, furthest_point_sample(xyz, npoint))   # (B,3,P)
    if idx is None:
        idx = query_knn(k, xyz, new_xyz)
    grouped_xyz = group_points(xyz, idx) - new_xyz[:, :, :, None]      # (B,3,P,K)
    if points is not None:
        grouped_points = group_points(points, idx)
        new_points = (jnp.concatenate([grouped_xyz, grouped_points], axis=1)
                      if use_xyz else grouped_points)
    else:
        new_points = grouped_xyz
    return new_xyz, new_points, idx, grouped_xyz


def sample_and_group_all(xyz, points, use_xyz=True):
    b, _, n = xyz.shape
    new_xyz = jnp.zeros((b, 3, 1), jnp.float32)
    grouped_xyz = xyz.reshape(b, 3, 1, n)
    idx = jnp.broadcast_to(jnp.arange(n, dtype=jnp.int32).reshape(1, 1, n),
                           (b, 1, n))
    if points is not None:
        new_points = jnp.concatenate([xyz, points], 1) if use_xyz else points
        new_points = new_points[:, :, None, :]
    else:
        new_points = grouped_xyz
    return new_xyz, new_points, idx, grouped_xyz


# ---------------------------------------------------------------------------
# Module wrapper (PointNet_SA_Module_KNN.forward)
# ---------------------------------------------------------------------------
def _fold_bn(w, b, bn, eps=1e-5):
    # TODO(synk): BatchNorm2d folded in inference (running-stats) form; train-mode batch statistics are not modeled.
    scale = bn["gamma"] / jnp.sqrt(bn["var"] + eps)
    return w * scale[:, None], ((b[:, 0] - bn["mean"]) * scale + bn["beta"])[:, None]


def pointnet_sa_module_knn_forward(xyz, points, params, *, npoint, nsample,
                                   group_all=False, use_xyz=True, if_idx=False,
                                   idx=None):
    """xyz: (B, 3, N), points: (B, f, N) or None -> (new_xyz, new_points[, idx])."""
    weights, biases = [], []
    for layer in params["layers"]:
        w, b = layer["w"], layer["b"]
        if layer["bn"] is not None:
            w, b = _fold_bn(w, b, layer["bn"])
        weights.append(w)
        biases.append(b)

    if group_all:
        new_xyz, new_points, idx, _ = sample_and_group_all(xyz, points, use_xyz)
        # Relabel (B, C, 1, N) -> (B, C, N, 1): run the shared MLP with N on
        # lanes (K=1 makes the in-kernel pool a no-op), then global-max here.
        feats = pallas_mlp_maxpool(jnp.transpose(new_points, (0, 1, 3, 2)),
                                   weights, biases)
        new_feats = jnp.max(feats, axis=2, keepdims=True)
    else:
        new_xyz, new_points, idx, _ = sample_and_group_knn(
            xyz, points, npoint, nsample, use_xyz, idx=idx)
        new_feats = pallas_mlp_maxpool(new_points, weights, biases)   # kernel B

    if if_idx:
        return new_xyz, new_feats, idx
    return new_xyz, new_feats


def init_params(key, in_channel, mlp_dims, if_bn=True):
    layers = []
    last = in_channel
    ks = jax.random.split(key, 6 * len(mlp_dims))
    for i, out in enumerate(mlp_dims):
        is_last = i == len(mlp_dims) - 1
        k0, k1, k2, k3, k4, k5 = (ks[6 * i + j] for j in range(6))
        w = 0.1 * jax.random.normal(k0, (out, last), jnp.float32)
        b = 0.1 * jax.random.normal(k1, (out, 1), jnp.float32)
        bn = None
        if if_bn and not is_last:
            bn = {"gamma": 1.0 + 0.1 * jax.random.normal(k2, (out,), jnp.float32),
                  "beta": 0.1 * jax.random.normal(k3, (out,), jnp.float32),
                  "mean": 0.1 * jax.random.normal(k4, (out,), jnp.float32),
                  "var": 0.5 + jnp.abs(jax.random.normal(k5, (out,), jnp.float32))}
        layers.append({"w": w, "b": b, "bn": bn})
        last = out
    return {"layers": layers}


# ---------------------------------------------------------------------------
# Pure-JAX reference (mirrors the PyTorch module, eval-mode BN)
# ---------------------------------------------------------------------------
def ref_forward(xyz, points, params, *, npoint, nsample, group_all=False,
                use_xyz=True, idx=None, eps=1e-5):
    if group_all:
        new_xyz, new_points, idx, _ = sample_and_group_all(xyz, points, use_xyz)
    else:
        new_xyz = gather_points(xyz, furthest_point_sample(xyz, npoint))
        if idx is None:
            src = jnp.transpose(new_xyz, (0, 2, 1))
            dst = jnp.transpose(xyz, (0, 2, 1))
            d = (-2.0 * jnp.matmul(src, jnp.transpose(dst, (0, 2, 1)),
                                   precision="highest")
                 + jnp.sum(src ** 2, -1)[:, :, None]
                 + jnp.sum(dst ** 2, -1)[:, None, :])
            idx = lax.top_k(-d, nsample)[1].astype(jnp.int32)
        grouped_xyz = group_points(xyz, idx) - new_xyz[:, :, :, None]
        if points is not None:
            gp = group_points(points, idx)
            new_points = (jnp.concatenate([grouped_xyz, gp], 1)
                          if use_xyz else gp)
        else:
            new_points = grouped_xyz

    h = new_points
    n_layers = len(params["layers"])
    for i, layer in enumerate(params["layers"]):
        h = (jnp.einsum("oc,bcpk->bopk", layer["w"], h, precision="highest")
             + layer["b"][None, :, :, None])
        if layer["bn"] is not None:
            bn = layer["bn"]
            scale = bn["gamma"] / jnp.sqrt(bn["var"] + eps)
            h = ((h - bn["mean"][None, :, None, None])
                 * scale[None, :, None, None] + bn["beta"][None, :, None, None])
        if i < n_layers - 1:
            h = jnp.maximum(h, 0.0)
    return new_xyz, jnp.max(h, axis=3), idx


if __name__ == "__main__":
    B, N, F_IN = 2, 256, 8
    NPOINT, NSAMPLE = 128, 16          # npoint=128 keeps the output lane-dense
    MLP_DIMS = [32, 64]
    USE_XYZ, IF_BN = True, True

    key = jax.random.PRNGKey(0)
    kx, kp, kpar = jax.random.split(key, 3)
    xyz = jax.random.normal(kx, (B, 3, N), jnp.float32)
    points = jax.random.normal(kp, (B, F_IN, N), jnp.float32)

    in_channel = F_IN + (3 if USE_XYZ else 0)
    params = init_params(kpar, in_channel, MLP_DIMS, if_bn=IF_BN)

    # Check 1: Pallas pairwise-distance kernel vs torch's square_distance formula.
    new_xyz_q = gather_points(xyz, furthest_point_sample(xyz, NPOINT))
    d_pl = pallas_square_distance(new_xyz_q, xyz)
    src = jnp.transpose(new_xyz_q, (0, 2, 1))
    dst = jnp.transpose(xyz, (0, 2, 1))
    d_ref = (-2.0 * jnp.matmul(src, jnp.transpose(dst, (0, 2, 1)),
                               precision="highest")
             + jnp.sum(src ** 2, -1)[:, :, None]
             + jnp.sum(dst ** 2, -1)[:, None, :])
    jax.block_until_ready(d_pl)
    assert jnp.allclose(d_pl, d_ref, atol=1e-3, rtol=1e-3)

    # Full forward with both Pallas kernels inside.
    fwd = jax.jit(functools.partial(
        pointnet_sa_module_knn_forward, npoint=NPOINT, nsample=NSAMPLE,
        group_all=False, use_xyz=USE_XYZ, if_idx=True))
    new_xyz, new_feats, idx = fwd(xyz, points, params)
    jax.block_until_ready(new_feats)
    assert new_xyz.shape == (B, 3, NPOINT)
    assert new_feats.shape == (B, MLP_DIMS[-1], NPOINT)
    assert idx.shape == (B, NPOINT, NSAMPLE)

    # Check 2: end-to-end vs the pure-JAX reference.  The same idx is passed
    # (mirroring the module's `idx=` argument) so neighbor-ordering ties in the
    # k-NN sort cannot make the comparison flaky.
    r_xyz, r_feats, _ = ref_forward(xyz, points, params, npoint=NPOINT,
                                    nsample=NSAMPLE, group_all=False,
                                    use_xyz=USE_XYZ, idx=idx)
    assert jnp.allclose(new_xyz, r_xyz, atol=1e-5, rtol=1e-5)
    assert jnp.allclose(new_feats, r_feats, atol=1e-3, rtol=1e-3)

    print("KERNEL_OK")
</pallas_src>

<mosaic_0001>
module attributes {stable_mosaic.version = 11 : i64} {
  func.func @_sqdist_kernel(%arg0: i32, %arg1: memref<1x128x3xf32, #tpu.memory_space<vmem>>, %arg2: memref<1x3x256xf32, #tpu.memory_space<vmem>>, %arg3: memref<1x128x256xf32, #tpu.memory_space<vmem>>) attributes {dimension_semantics = [#tpu.dimension_semantics<parallel>], iteration_bounds = array<i64: 2>, scalar_prefetch = 0 : i64, scratch_operands = 0 : i64, tpu.core_type = #tpu.core_type<tc>, window_params = [{transform_indices = @transform_0, window_bounds = array<i64: 1, 128, 3>}, {transform_indices = @transform_1, window_bounds = array<i64: 1, 3, 256>}, {transform_indices = @transform_2, window_bounds = array<i64: 1, 128, 256>}]} {
    %c0 = arith.constant 0 : index
    %c0_0 = arith.constant 0 : index
    %c0_1 = arith.constant 0 : index
    %0 = vector.load %arg1[%c0, %c0_0, %c0_1] : memref<1x128x3xf32, #tpu.memory_space<vmem>>, vector<1x128x3xf32>
    %1 = vector.shape_cast %0 : vector<1x128x3xf32> to vector<128x3xf32>
    %c0_2 = arith.constant 0 : index
    %c0_3 = arith.constant 0 : index
    %c0_4 = arith.constant 0 : index
    %2 = vector.load %arg2[%c0_2, %c0_3, %c0_4] : memref<1x3x256xf32, #tpu.memory_space<vmem>>, vector<1x3x256xf32>
    %3 = vector.shape_cast %2 : vector<1x3x256xf32> to vector<3x256xf32>
    %4 = vector.extract_strided_slice %1 {offsets = [0, 0], sizes = [128, 1], strides = [1, 1]} : vector<128x3xf32> to vector<128x1xf32>
    %5 = vector.extract_strided_slice %3 {offsets = [0, 0], sizes = [1, 256], strides = [1, 1]} : vector<3x256xf32> to vector<1x256xf32>
    %6 = vector.broadcast %4 : vector<128x1xf32> to vector<128x256xf32>
    %7 = vector.broadcast %5 : vector<1x256xf32> to vector<128x256xf32>
    %8 = arith.mulf %6, %7 : vector<128x256xf32>
    %9 = vector.extract_strided_slice %1 {offsets = [0, 1], sizes = [128, 1], strides = [1, 1]} : vector<128x3xf32> to vector<128x1xf32>
    %10 = vector.extract_strided_slice %3 {offsets = [1, 0], sizes = [1, 256], strides = [1, 1]} : vector<3x256xf32> to vector<1x256xf32>
    %11 = vector.broadcast %9 : vector<128x1xf32> to vector<128x256xf32>
    %12 = vector.broadcast %10 : vector<1x256xf32> to vector<128x256xf32>
    %13 = arith.mulf %11, %12 : vector<128x256xf32>
    %14 = arith.addf %8, %13 : vector<128x256xf32>
    %15 = vector.extract_strided_slice %1 {offsets = [0, 2], sizes = [128, 1], strides = [1, 1]} : vector<128x3xf32> to vector<128x1xf32>
    %16 = vector.extract_strided_slice %3 {offsets = [2, 0], sizes = [1, 256], strides = [1, 1]} : vector<3x256xf32> to vector<1x256xf32>
    %17 = vector.broadcast %15 : vector<128x1xf32> to vector<128x256xf32>
    %18 = vector.broadcast %16 : vector<1x256xf32> to vector<128x256xf32>
    %19 = arith.mulf %17, %18 : vector<128x256xf32>
    %20 = arith.addf %14, %19 : vector<128x256xf32>
    %21 = arith.mulf %1, %1 : vector<128x3xf32>
    %cst = arith.constant dense<0.000000e+00> : vector<128xf32>
    %22 = vector.multi_reduction <add>, %21, %cst [1] : vector<128x3xf32> to vector<128xf32>
    %23 = vector.shape_cast %22 : vector<128xf32> to vector<128x1xf32>
    %24 = arith.mulf %3, %3 : vector<3x256xf32>
    %cst_5 = arith.constant dense<0.000000e+00> : vector<256xf32>
    %25 = vector.multi_reduction <add>, %24, %cst_5 [0] : vector<3x256xf32> to vector<256xf32>
    %26 = vector.shape_cast %25 : vector<256xf32> to vector<1x256xf32>
    %27 = vector.broadcast %23 : vector<128x1xf32> to vector<128x256xf32>
    %28 = vector.broadcast %26 : vector<1x256xf32> to vector<128x256xf32>
    %29 = arith.addf %27, %28 : vector<128x256xf32>
    %cst_6 = arith.constant 2.000000e+00 : f32
    %30 = vector.broadcast %cst_6 : f32 to vector<128x256xf32>
    %31 = arith.mulf %30, %20 : vector<128x256xf32>
    %32 = arith.subf %29, %31 : vector<128x256xf32>
    %c0_7 = arith.constant 0 : index
    %c0_8 = arith.constant 0 : index
    %c0_9 = arith.constant 0 : index
    %33 = vector.load %arg3[%c0_7, %c0_8, %c0_9] : memref<1x128x256xf32, #tpu.memory_space<vmem>>, vector<1x128x256xf32>
    %34 = vector.shape_cast %33 : vector<1x128x256xf32> to vector<128x256xf32>
    %35 = vector.shape_cast %32 : vector<128x256xf32> to vector<1x128x256xf32>
    tpu.vector_store %arg3[%c0_7, %c0_8, %c0_9], %35 {strides = array<i32>} : memref<1x128x256xf32, #tpu.memory_space<vmem>>, vector<1x128x256xf32>,
    return
  }
  func.func @transform_0(%arg0: i32) -> (i32, i32, i32) {
    %c0_i32 = arith.constant 0 : i32
    %c0_i32_0 = arith.constant 0 : i32
    %c0_i32_1 = arith.constant 0 : i32
    return %arg0, %c0_i32, %c0_i32_0 : i32, i32, i32
  }
  func.func @transform_1(%arg0: i32) -> (i32, i32, i32) {
    %c0_i32 = arith.constant 0 : i32
    %c0_i32_0 = arith.constant 0 : i32
    %c0_i32_1 = arith.constant 0 : i32
    return %arg0, %c0_i32, %c0_i32_0 : i32, i32, i32
  }
  func.func @transform_2(%arg0: i32) -> (i32, i32, i32) {
    %c0_i32 = arith.constant 0 : i32
    %c0_i32_0 = arith.constant 0 : i32
    %c0_i32_1 = arith.constant 0 : i32
    return %arg0, %c0_i32, %c0_i32_0 : i32, i32, i32
  }
}

</mosaic_0001>

<llo_original>
// kernel: tpu_custom_call.1
$region0: #{tpu_custom_call.1}
  #allocation0 [shape = 'u32[]', space=smem, size = 0x4, offset = 0x4, fixed_abs, tag = 'smem constant byte address 0x4 - core index']
  #allocation1 [shape = 'u32[144,128]{1,0:T(1,128)}', space=vmem, size = 0x12000, scoped, tag = 'internal scratch']
  %s0 = inlined_call_operand.vmem [shape: f32[2,128,3], index: 0, kind: input, shape index: {}]
  %s1 = inlined_call_operand.vmem [shape: f32[2,3,256], index: 1, kind: input, shape index: {}]
  %s2 = inlined_call_operand.hbm [shape: f32[2,128,256], index: 2, kind: output, shape index: {}]
  %s3 = sld [smem:[#allocation0]]
  $region41: #{tpu_custom_call.1} parent=0
    _
  %s5 = ssub.s32 1, %s3
  %s6 = scalar_select 0, %s5, %s3
  $region1: #{tpu_custom_call.1} parent=0
    #allocation2 [shape = 'u8[262144]{0}', space=vmem, size = 0x40000, scoped, tag = 'output window, operand 0']
    #allocation3 [shape = 's32[2]{0}', space=sflag, size = 0x8, scoped, tag = 'scoped memory for tpu_custom_call.1']
    %7 = vsyncpa [#allocation3], 0
    %s8 = scalar_lea.sflag [#allocation3], 1
    %9 = vsyncpa %s8, 0
    loop: start=0, step=1, limit=4
    $region2: #{tpu_custom_call.1} parent=1 // loop_pre_header
      _
    $region3: #{tpu_custom_call.1} parent=1 // loop_header
      %s11 = sphi 0, %s15
      %p12 = scmp.ge.s32.totalorder %s11, 4
      %s21 = sphi 0, %s23
      %s24 = sphi 0, %s21
      %s25 = sphi 0, %s24
      %s41 = sphi 0, %s25
      %s47 = sphi 0, %s49
      %s50 = sphi 0, %s47
      %s51 = sphi 0, %s50
      %s67 = sphi 0, %s51
      %s73 = sphi 0, %s75
      %s76 = sphi 0, %s73
      %s77 = sphi 0, %s76
      %s93 = sphi 0, %s77
    $region4: #{tpu_custom_call.1} parent=1 // loop_header_branch
      %14 = sbr.rel (%p12) target = $region8
    $region5: #{tpu_custom_call.1} parent=1 // loop_body
      %s16 = ssub.s32 %s11, 1
      %s17 = ssub.s32 %s11, 2
      %s18 = sadd.s32 %s11, 1
      %s19 = ssub.s32 %s11, %s18
      %p20 = scmp.eq.s32.totalorder %s19, 0
      %s22 = sadd.s32 %s21, 1
      %s23 = scalar_select %p20, %s21, %s22
      %p26 = pneg %p20
      %p27 = scmp.eq.s32.totalorder %s11, 1
      %p28 = por %p26, %p27
      %p29 = scmp.ne.s32.totalorder %s21, %s24
      %p30 = scmp.eq.s32.totalorder %s11, 0
      %p31 = por %p29, %p30
      %p32 = scmp.ne.s32.totalorder %s21, %s24
      %p33 = scmp.eq.s32.totalorder %s16, 1
      %p34 = por %p32, %p33
      %p35 = scmp.ne.s32.totalorder %s24, %s25
      %p36 = scmp.eq.s32.totalorder %s16, 0
      %p37 = por %p35, %p36
      %p38 = scmp.ne.s32.totalorder %s24, %s25
      %p39 = scmp.eq.s32.totalorder %s17, 1
      %p40 = por %p38, %p39
      %p42 = scmp.ne.s32.totalorder %s25, %s41
      %p43 = scmp.eq.s32.totalorder %s17, 0
      %p44 = por %p42, %p43
      %s45 = ssub.s32 %s11, %s18
      %p46 = scmp.eq.s32.totalorder %s45, 0
      %s48 = sadd.s32 %s47, 1
      %s49 = scalar_select %p46, %s47, %s48
      %p52 = pneg %p46
      %p53 = scmp.eq.s32.totalorder %s11, 1
      %p54 = por %p52, %p53
      %p55 = scmp.ne.s32.totalorder %s47, %s50
      %p56 = scmp.eq.s32.totalorder %s11, 0
      %p57 = por %p55, %p56
      %p58 = scmp.ne.s32.totalorder %s47, %s50
      %p59 = scmp.eq.s32.totalorder %s16, 1
      %p60 = por %p58, %p59
      %p61 = scmp.ne.s32.totalorder %s50, %s51
      %p62 = scmp.eq.s32.totalorder %s16, 0
      %p63 = por %p61, %p62
      %p64 = scmp.ne.s32.totalorder %s50, %s51
      %p65 = scmp.eq.s32.totalorder %s17, 1
      %p66 = por %p64, %p65
      %p68 = scmp.ne.s32.totalorder %s51, %s67
      %p69 = scmp.eq.s32.totalorder %s17, 0
      %p70 = por %p68, %p69
      %s71 = ssub.s32 %s11, %s18
      %p72 = scmp.eq.s32.totalorder %s71, 0
      %s74 = sadd.s32 %s73, 1
      %s75 = scalar_select %p72, %s73, %s74
      %p78 = pneg %p72
      %p79 = scmp.eq.s32.totalorder %s11, 1
      %p80 = por %p78, %p79
      %p81 = scmp.ne.s32.totalorder %s73, %s76
      %p82 = scmp.eq.s32.totalorder %s11, 0
      %p83 = por %p81, %p82
      %p84 = scmp.ne.s32.totalorder %s73, %s76
      %p85 = scmp.eq.s32.totalorder %s16, 1
      %p86 = por %p84, %p85
      %p87 = scmp.ne.s32.totalorder %s76, %s77
      %p88 = scmp.eq.s32.totalorder %s16, 0
      %p89 = por %p87, %p88
      %p90 = scmp.ne.s32.totalorder %s76, %s77
      %p91 = scmp.eq.s32.totalorder %s17, 1
      %p92 = por %p90, %p91
      %p94 = scmp.ne.s32.totalorder %s77, %s93
      %p95 = scmp.eq.s32.totalorder %s17, 0
      %p96 = por %p94, %p95
      %p97 = scmp.le.s32.totalorder 1, %s11
      %p98 = scmp.lt.s32.totalorder %s11, 3
      %p99 = pnand %p97, %p98
      %p100 = pneg %p99
      // Predicated region
      $region9: #{tpu_custom_call.1} parent=5 // pred_check
        _
      $region10: #{tpu_custom_call.1} parent=5 // pred_check_branch
        %102 = sbr.rel (%p99) target = $region12
      $region11: #{tpu_custom_call.1} parent=5 // pred_region
        %s103 = ssub.s32 %s11, 1
      $region12: #{tpu_custom_call.1} parent=5 // pred_fallthru
        _
      %p104 = scmp.lt.s32.totalorder %s11, 2
      // Predicated region
      $region13: #{tpu_custom_call.1} parent=5 // pred_check
        %p105 = pneg %p104
      $region14: #{tpu_custom_call.1} parent=5 // pred_check_branch
        %107 = sbr.rel (%p105) target = $region16
      $region15: #{tpu_custom_call.1} parent=5 // pred_region
        // Predicated region
        $region17: #{tpu_custom_call.1} parent=15 // pred_check
          %p108 = pneg %p31
        $region18: #{tpu_custom_call.1} parent=15 // pred_check_branch
          %110 = sbr.rel (%p108) target = $region20
        $region19: #{tpu_custom_call.1} parent=15 // pred_region
          %p111 = scmp.lt.s32.totalorder %s11, 1
          %s112 = scalar_select %p111, %s11, 1
          %s113 = smul.addr %s112, 16
          %s114 = smul.addr %s113, 8
          %s115 = scalar_lea.vmem %s0, %s114
        $region20: #{tpu_custom_call.1} parent=15 // pred_fallthru
          _
        // Predicated region
        $region21: #{tpu_custom_call.1} parent=15 // pred_check
          %p116 = pneg %p57
        $region22: #{tpu_custom_call.1} parent=15 // pred_check_branch
          %118 = sbr.rel (%p116) target = $region24
        $region23: #{tpu_custom_call.1} parent=15 // pred_region
          %p119 = scmp.lt.s32.totalorder %s11, 1
          %s120 = scalar_select %p119, %s11, 1
          %s121 = smul.addr %s120, 2
          %s122 = smul.addr %s121, 4
          %s123 = scalar_lea.vmem %s1, %s122
        $region24: #{tpu_custom_call.1} parent=15 // pred_fallthru
          _
      $region16: #{tpu_custom_call.1} parent=5 // pred_fallthru
        _
      %p124 = scmp.le.s32.totalorder 1, %s11
      %p125 = scmp.lt.s32.totalorder %s11, 3
      %p126 = pnand %p124, %p125
      %p127 = pneg %p126
      // Predicated region
      $region25: #{tpu_custom_call.1} parent=5 // pred_check
        _
      $region26: #{tpu_custom_call.1} parent=5 // pred_check_branch
        %129 = sbr.rel (%p126) target = $region28
      $region27: #{tpu_custom_call.1} parent=5 // pred_region
        %s130 = ssub.s32 %s11, 1
        %p131 = scmp.lt.s32.totalorder %s16, 1
        %s132 = scalar_select %p131, %s16, 1
        %s133 = smul.addr %s132, 16
        %s134 = smul.addr %s133, 8
        %s135 = scalar_lea.vmem %s0, %s134
        %p136 = pneg %p37
        %p137 = pneg %p34
        %p138 = scmp.lt.s32.totalorder %s16, 1
        %s139 = scalar_select %p138, %s16, 1
        %s140 = smul.addr %s139, 2
        %s141 = smul.addr %s140, 4
        %s142 = scalar_lea.vmem %s1, %s141
        %p143 = pneg %p63
        %p144 = pneg %p60
        %p145 = pneg %p89
        %p146 = pneg %p86
        %s147 = sand.u32 %s76, 1
        %s148 = scalar_lea.sflag [#allocation3], %s147
        %s149 = sand.u32 %s76, 1
        %s150 = smul.addr %s149, 256
        %s151 = scalar_lea.vmem [#allocation2], %s150
        %p152 = scmp.lt.s32.totalorder %s16, 1
        %s153 = scalar_select %p152, %s16, 1
        %s154 = smul.addr %s153, 16
        %s155 = smul.addr %s154, 8
        %s156 = scalar_lea.vmem %s0, %s155
        %p157 = scmp.lt.s32.totalorder %s16, 1
        %s158 = scalar_select %p157, %s16, 1
        %s159 = smul.addr %s158, 2
        %s160 = smul.addr %s159, 4
        %s161 = scalar_lea.vmem %s1, %s160
        %v162 = vld [vmem:[%s156] sm:$0xff]
        %v163 = vld [vmem:[%s156 + $0x8] sm:$0xff]
        %v164 = vld [vmem:[%s156 + $0x10] sm:$0xff]
        %v165 = vld [vmem:[%s156 + $0x18] sm:$0xff]
        %v166 = vld [vmem:[%s156 + $0x20] sm:$0xff]
        %v167 = vld [vmem:[%s156 + $0x28] sm:$0xff]
        %v168 = vld [vmem:[%s156 + $0x30] sm:$0xff]
        %v169 = vld [vmem:[%s156 + $0x38] sm:$0xff]
        %v170 = vld [vmem:[%s156 + $0x40] sm:$0xff]
        %v171 = vld [vmem:[%s156 + $0x48] sm:$0xff]
        %v172 = vld [vmem:[%s156 + $0x50] sm:$0xff]
        %v173 = vld [vmem:[%s156 + $0x58] sm:$0xff]
        %v174 = vld [vmem:[%s156 + $0x60] sm:$0xff]
        %v175 = vld [vmem:[%s156 + $0x68] sm:$0xff]
        %v176 = vld [vmem:[%s156 + $0x70] sm:$0xff]
        %v177 = vld [vmem:[%s156 + $0x78] sm:$0xff]
        %v178 = vld [vmem:[%s161] sm:$0x77]
        %180 = vset.pattern.permute.xlu0 0
        %181 = vperm.xlu0 %180, %v162
        %v182 = vpop.permute.xlu0 %181
        %185 = vset.pattern.permute.xlu0 0
        %186 = vperm.xlu0 %185, %v163
        %v187 = vpop.permute.xlu0 %186
        %190 = vset.pattern.permute.xlu0 0
        %191 = vperm.xlu0 %190, %v164
        %v192 = vpop.permute.xlu0 %191
        %195 = vset.pattern.permute.xlu0 0
        %196 = vperm.xlu0 %195, %v165
        %v197 = vpop.permute.xlu0 %196
        %200 = vset.pattern.permute.xlu0 0
        %201 = vperm.xlu0 %200, %v166
        %v202 = vpop.permute.xlu0 %201
        %205 = vset.pattern.permute.xlu0 0
        %206 = vperm.xlu0 %205, %v167
        %v207 = vpop.permute.xlu0 %206
        %210 = vset.pattern.permute.xlu0 0
        %211 = vperm.xlu0 %210, %v168
        %v212 = vpop.permute.xlu0 %211
        %215 = vset.pattern.permute.xlu0 0
        %216 = vperm.xlu0 %215, %v169
        %v217 = vpop.permute.xlu0 %216
        %220 = vset.pattern.permute.xlu0 0
        %221 = vperm.xlu0 %220, %v170
        %v222 = vpop.permute.xlu0 %221
        %225 = vset.pattern.permute.xlu0 0
        %226 = vperm.xlu0 %225, %v171
        %v227 = vpop.permute.xlu0 %226
        %230 = vset.pattern.permute.xlu0 0
        %231 = vperm.xlu0 %230, %v172
        %v232 = vpop.permute.xlu0 %231
        %235 = vset.pattern.permute.xlu0 0
        %236 = vperm.xlu0 %235, %v173
        %v237 = vpop.permute.xlu0 %236
        %240 = vset.pattern.permute.xlu0 0
        %241 = vperm.xlu0 %240, %v174
        %v242 = vpop.permute.xlu0 %241
        %245 = vset.pattern.permute.xlu0 0
        %246 = vperm.xlu0 %245, %v175
        %v247 = vpop.permute.xlu0 %246
        %250 = vset.pattern.permute.xlu0 0
        %251 = vperm.xlu0 %250, %v176
        %v252 = vpop.permute.xlu0 %251
        %255 = vset.pattern.permute.xlu0 0
        %256 = vperm.xlu0 %255, %v177
        %v257 = vpop.permute.xlu0 %256
        %v260 = vlaneseq
        %v261 = vshrl.u32 %v260, 7
        %v262 = vsub.s32 0, %v261
        %v263 = vrot.slane %v178, %v262
        %v264 = vlaneseq
        %v265 = vshrl.u32 %v264, 7
        %v266 = vsub.s32 4, %v265
        %v267 = vrot.slane %v178, %v266
        %v270 = vlaneseq
        %v271 = vshrl.u32 %v270, 7
        %v272 = vsub.s32 0, %v271
        %v273 = vrot.slane %v263, %v272
        %v274 = vlaneseq
        %v275 = vshrl.u32 %v274, 7
        %v276 = vsub.s32 0, %v275
        %v277 = vrot.slane %v267, %v276
        %v278 = vmul.f32 %v182, %v273
        %v279 = vmul.f32 %v182, %v277
        %v280 = vmul.f32 %v187, %v273
        %v281 = vmul.f32 %v187, %v277
        %v282 = vmul.f32 %v192, %v273
        %v283 = vmul.f32 %v192, %v277
        %v284 = vmul.f32 %v197, %v273
        %v285 = vmul.f32 %v197, %v277
        %v286 = vmul.f32 %v202, %v273
        %v287 = vmul.f32 %v202, %v277
        %v288 = vmul.f32 %v207, %v273
        %v289 = vmul.f32 %v207, %v277
        %v290 = vmul.f32 %v212, %v273
        %v291 = vmul.f32 %v212, %v277
        %v292 = vmul.f32 %v217, %v273
        %v293 = vmul.f32 %v217, %v277
        %v294 = vmul.f32 %v222, %v273
        %v295 = vmul.f32 %v222, %v277
        %v296 = vmul.f32 %v227, %v273
        %v297 = vmul.f32 %v227, %v277
        %v298 = vmul.f32 %v232, %v273
        %v299 = vmul.f32 %v232, %v277
        %v300 = vmul.f32 %v237, %v273
        %v301 = vmul.f32 %v237, %v277
        %v302 = vmul.f32 %v242, %v273
        %v303 = vmul.f32 %v242, %v277
        %v304 = vmul.f32 %v247, %v273
        %v305 = vmul.f32 %v247, %v277
        %v306 = vmul.f32 %v252, %v273
        %v307 = vmul.f32 %v252, %v277
        %v308 = vmul.f32 %v257, %v273
        %v309 = vmul.f32 %v257, %v277
        %310 = vset.pattern.permute.xlu0 1
        %311 = vperm.xlu0 %310, %v162
        %v312 = vpop.permute.xlu0 %311
        %314 = vset.pattern.permute.xlu0 1
        %315 = vperm.xlu0 %314, %v163
        %v316 = vpop.permute.xlu0 %315
        %318 = vset.pattern.permute.xlu0 1
        %319 = vperm.xlu0 %318, %v164
        %v320 = vpop.permute.xlu0 %319
        %322 = vset.pattern.permute.xlu0 1
        %323 = vperm.xlu0 %322, %v165
        %v324 = vpop.permute.xlu0 %323
        %326 = vset.pattern.permute.xlu0 1
        %327 = vperm.xlu0 %326, %v166
        %v328 = vpop.permute.xlu0 %327
        %330 = vset.pattern.permute.xlu0 1
        %331 = vperm.xlu0 %330, %v167
        %v332 = vpop.permute.xlu0 %331
        %334 = vset.pattern.permute.xlu0 1
        %335 = vperm.xlu0 %334, %v168
        %v336 = vpop.permute.xlu0 %335
        %338 = vset.pattern.permute.xlu0 1
        %339 = vperm.xlu0 %338, %v169
        %v340 = vpop.permute.xlu0 %339
        %342 = vset.pattern.permute.xlu0 1
        %343 = vperm.xlu0 %342, %v170
        %v344 = vpop.permute.xlu0 %343
        %346 = vset.pattern.permute.xlu0 1
        %347 = vperm.xlu0 %346, %v171
        %v348 = vpop.permute.xlu0 %347
        %350 = vset.pattern.permute.xlu0 1
        %351 = vperm.xlu0 %350, %v172
        %v352 = vpop.permute.xlu0 %351
        %354 = vset.pattern.permute.xlu0 1
        %355 = vperm.xlu0 %354, %v173
        %v356 = vpop.permute.xlu0 %355
        %358 = vset.pattern.permute.xlu0 1
        %359 = vperm.xlu0 %358, %v174
        %v360 = vpop.permute.xlu0 %359
        %362 = vset.pattern.permute.xlu0 1
        %363 = vperm.xlu0 %362, %v175
        %v364 = vpop.permute.xlu0 %363
        %366 = vset.pattern.permute.xlu0 1
        %367 = vperm.xlu0 %366, %v176
        %v368 = vpop.permute.xlu0 %367
        %370 = vset.pattern.permute.xlu0 1
        %371 = vperm.xlu0 %370, %v177
        %v372 = vpop.permute.xlu0 %371
        %v374 = vlaneseq
        %v375 = vshrl.u32 %v374, 7
        %v376 = vsub.s32 1, %v375
        %v377 = vrot.slane %v178, %v376
        %v378 = vlaneseq
        %v379 = vshrl.u32 %v378, 7
        %v380 = vsub.s32 5, %v379
        %v381 = vrot.slane %v178, %v380
        %v384 = vlaneseq
        %v385 = vshrl.u32 %v384, 7
        %v386 = vsub.s32 1, %v385
        %v387 = vrot.slane %v377, %v386
        %v388 = vlaneseq
        %v389 = vshrl.u32 %v388, 7
        %v390 = vsub.s32 1, %v389
        %v391 = vrot.slane %v381, %v390
        %v392 = vmul.f32 %v312, %v387
        %v393 = vmul.f32 %v312, %v391
        %v394 = vmul.f32 %v316, %v387
        %v395 = vmul.f32 %v316, %v391
        %v396 = vmul.f32 %v320, %v387
        %v397 = vmul.f32 %v320, %v391
        %v398 = vmul.f32 %v324, %v387
        %v399 = vmul.f32 %v324, %v391
        %v400 = vmul.f32 %v328, %v387
        %v401 = vmul.f32 %v328, %v391
        %v402 = vmul.f32 %v332, %v387
        %v403 = vmul.f32 %v332, %v391
        %v404 = vmul.f32 %v336, %v387
        %v405 = vmul.f32 %v336, %v391
        %v406 = vmul.f32 %v340, %v387
        %v407 = vmul.f32 %v340, %v391
        %v408 = vmul.f32 %v344, %v387
        %v409 = vmul.f32 %v344, %v391
        %v410 = vmul.f32 %v348, %v387
        %v411 = vmul.f32 %v348, %v391
        %v412 = vmul.f32 %v352, %v387
        %v413 = vmul.f32 %v352, %v391
        %v414 = vmul.f32 %v356, %v387
        %v415 = vmul.f32 %v356, %v391
        %v416 = vmul.f32 %v360, %v387
        %v417 = vmul.f32 %v360, %v391
        %v418 = vmul.f32 %v364, %v387
        %v419 = vmul.f32 %v364, %v391
        %v420 = vmul.f32 %v368, %v387
        %v421 = vmul.f32 %v368, %v391
        %v422 = vmul.f32 %v372, %v387
        %v423 = vmul.f32 %v372, %v391
        %v424 = vadd.f32 %v278, %v392
        %v425 = vadd.f32 %v279, %v393
        %v426 = vadd.f32 %v280, %v394
        %v427 = vadd.f32 %v281, %v395
        %v428 = vadd.f32 %v282, %v396
        %v429 = vadd.f32 %v283, %v397
        %v430 = vadd.f32 %v284, %v398
        %v431 = vadd.f32 %v285, %v399
        %v432 = vadd.f32 %v286, %v400
        %v433 = vadd.f32 %v287, %v401
        %v434 = vadd.f32 %v288, %v402
        %v435 = vadd.f32 %v289, %v403
        %v436 = vadd.f32 %v290, %v404
        %v437 = vadd.f32 %v291, %v405
        %v438 = vadd.f32 %v292, %v406
        %v439 = vadd.f32 %v293, %v407
        %v440 = vadd.f32 %v294, %v408
        %v441 = vadd.f32 %v295, %v409
        %v442 = vadd.f32 %v296, %v410
        %v443 = vadd.f32 %v297, %v411
        %v444 = vadd.f32 %v298, %v412
        %v445 = vadd.f32 %v299, %v413
        %v446 = vadd.f32 %v300, %v414
        %v447 = vadd.f32 %v301, %v415
        %v448 = vadd.f32 %v302, %v416
        %v449 = vadd.f32 %v303, %v417
        %v450 = vadd.f32 %v304, %v418
        %v451 = vadd.f32 %v305, %v419
        %v452 = vadd.f32 %v306, %v420
        %v453 = vadd.f32 %v307, %v421
        %v454 = vadd.f32 %v308, %v422
        %v455 = vadd.f32 %v309, %v423
        %456 = vset.pattern.permute.xlu0 2
        %457 = vperm.xlu0 %456, %v162
        %v458 = vpop.permute.xlu0 %457
        %460 = vset.pattern.permute.xlu0 2
        %461 = vperm.xlu0 %460, %v163
        %v462 = vpop.permute.xlu0 %461
        %464 = vset.pattern.permute.xlu0 2
        %465 = vperm.xlu0 %464, %v164
        %v466 = vpop.permute.xlu0 %465
        %468 = vset.pattern.permute.xlu0 2
        %469 = vperm.xlu0 %468, %v165
        %v470 = vpop.permute.xlu0 %469
        %472 = vset.pattern.permute.xlu0 2
        %473 = vperm.xlu0 %472, %v166
        %v474 = vpop.permute.xlu0 %473
        %476 = vset.pattern.permute.xlu0 2
        %477 = vperm.xlu0 %476, %v167
        %v478 = vpop.permute.xlu0 %477
        %480 = vset.pattern.permute.xlu0 2
        %481 = vperm.xlu0 %480, %v168
        %v482 = vpop.permute.xlu0 %481
        %484 = vset.pattern.permute.xlu0 2
        %485 = vperm.xlu0 %484, %v169
        %v486 = vpop.permute.xlu0 %485
        %488 = vset.pattern.permute.xlu0 2
        %489 = vperm.xlu0 %488, %v170
        %v490 = vpop.permute.xlu0 %489
        %492 = vset.pattern.permute.xlu0 2
        %493 = vperm.xlu0 %492, %v171
        %v494 = vpop.permute.xlu0 %493
        %496 = vset.pattern.permute.xlu0 2
        %497 = vperm.xlu0 %496, %v172
        %v498 = vpop.permute.xlu0 %497
        %500 = vset.pattern.permute.xlu0 2
        %501 = vperm.xlu0 %500, %v173
        %v502 = vpop.permute.xlu0 %501
        %504 = vset.pattern.permute.xlu0 2
        %505 = vperm.xlu0 %504, %v174
        %v506 = vpop.permute.xlu0 %505
        %508 = vset.pattern.permute.xlu0 2
        %509 = vperm.xlu0 %508, %v175
        %v510 = vpop.permute.xlu0 %509
        %512 = vset.pattern.permute.xlu0 2
        %513 = vperm.xlu0 %512, %v176
        %v514 = vpop.permute.xlu0 %513
        %516 = vset.pattern.permute.xlu0 2
        %517 = vperm.xlu0 %516, %v177
        %v518 = vpop.permute.xlu0 %517
        %v520 = vlaneseq
        %v521 = vshrl.u32 %v520, 7
        %v522 = vsub.s32 2, %v521
        %v523 = vrot.slane %v178, %v522
        %v524 = vlaneseq
        %v525 = vshrl.u32 %v524, 7
        %v526 = vsub.s32 6, %v525
        %v527 = vrot.slane %v178, %v526
        %v530 = vlaneseq
        %v531 = vshrl.u32 %v530, 7
        %v532 = vsub.s32 2, %v531
        %v533 = vrot.slane %v523, %v532
        %v534 = vlaneseq
        %v535 = vshrl.u32 %v534, 7
        %v536 = vsub.s32 2, %v535
        %v537 = vrot.slane %v527, %v536
        %v538 = vmul.f32 %v458, %v533
        %v539 = vmul.f32 %v458, %v537
        %v540 = vmul.f32 %v462, %v533
        %v541 = vmul.f32 %v462, %v537
        %v542 = vmul.f32 %v466, %v533
        %v543 = vmul.f32 %v466, %v537
        %v544 = vmul.f32 %v470, %v533
        %v545 = vmul.f32 %v470, %v537
        %v546 = vmul.f32 %v474, %v533
        %v547 = vmul.f32 %v474, %v537
        %v548 = vmul.f32 %v478, %v533
        %v549 = vmul.f32 %v478, %v537
        %v550 = vmul.f32 %v482, %v533
        %v551 = vmul.f32 %v482, %v537
        %v552 = vmul.f32 %v486, %v533
        %v553 = vmul.f32 %v486, %v537
        %v554 = vmul.f32 %v490, %v533
        %v555 = vmul.f32 %v490, %v537
        %v556 = vmul.f32 %v494, %v533
        %v557 = vmul.f32 %v494, %v537
        %v558 = vmul.f32 %v498, %v533
        %v559 = vmul.f32 %v498, %v537
        %v560 = vmul.f32 %v502, %v533
        %v561 = vmul.f32 %v502, %v537
        %v562 = vmul.f32 %v506, %v533
        %v563 = vmul.f32 %v506, %v537
        %v564 = vmul.f32 %v510, %v533
        %v565 = vmul.f32 %v510, %v537
        %v566 = vmul.f32 %v514, %v533
        %v567 = vmul.f32 %v514, %v537
        %v568 = vmul.f32 %v518, %v533
        %v569 = vmul.f32 %v518, %v537
        %v570 = vadd.f32 %v424, %v538
        %v571 = vadd.f32 %v425, %v539
        %v572 = vadd.f32 %v426, %v540
        %v573 = vadd.f32 %v427, %v541
        %v574 = vadd.f32 %v428, %v542
        %v575 = vadd.f32 %v429, %v543
        %v576 = vadd.f32 %v430, %v544
        %v577 = vadd.f32 %v431, %v545
        %v578 = vadd.f32 %v432, %v546
        %v579 = vadd.f32 %v433, %v547
        %v580 = vadd.f32 %v434, %v548
        %v581 = vadd.f32 %v435, %v549
        %v582 = vadd.f32 %v436, %v550
        %v583 = vadd.f32 %v437, %v551
        %v584 = vadd.f32 %v438, %v552
        %v585 = vadd.f32 %v439, %v553
        %v586 = vadd.f32 %v440, %v554
        %v587 = vadd.f32 %v441, %v555
        %v588 = vadd.f32 %v442, %v556
        %v589 = vadd.f32 %v443, %v557
        %v590 = vadd.f32 %v444, %v558
        %v591 = vadd.f32 %v445, %v559
        %v592 = vadd.f32 %v446, %v560
        %v593 = vadd.f32 %v447, %v561
        %v594 = vadd.f32 %v448, %v562
        %v595 = vadd.f32 %v449, %v563
        %v596 = vadd.f32 %v450, %v564
        %v597 = vadd.f32 %v451, %v565
        %v598 = vadd.f32 %v452, %v566
        %v599 = vadd.f32 %v453, %v567
        %v600 = vadd.f32 %v454, %v568
        %v601 = vadd.f32 %v455, %v569
        %v602 = vmul.f32 %v162, %v162
        %v603 = vmul.f32 %v163, %v163
        %v604 = vmul.f32 %v164, %v164
        %v605 = vmul.f32 %v165, %v165
        %v606 = vmul.f32 %v166, %v166
        %v607 = vmul.f32 %v167, %v167
        %v608 = vmul.f32 %v168, %v168
        %v609 = vmul.f32 %v169, %v169
        %v610 = vmul.f32 %v170, %v170
        %v611 = vmul.f32 %v171, %v171
        %v612 = vmul.f32 %v172, %v172
        %v613 = vmul.f32 %v173, %v173
        %v614 = vmul.f32 %v174, %v174
        %v615 = vmul.f32 %v175, %v175
        %v616 = vmul.f32 %v176, %v176
        %v617 = vmul.f32 %v177, %v177
        %vm618 = vcmask 23552
        %v619 = vsel %vm618, %v602, 0.0
        %620 = vadd.xlane.f32.xlu0 %v619
        %v621 = vpop.xlane.xlu0 %620
        %v622 = vsel %vm618, %v603, 0.0
        %623 = vadd.xlane.f32.xlu0 %v622
        %v624 = vpop.xlane.xlu0 %623
        %v625 = vsel %vm618, %v604, 0.0
        %626 = vadd.xlane.f32.xlu0 %v625
        %v627 = vpop.xlane.xlu0 %626
        %v628 = vsel %vm618, %v605, 0.0
        %629 = vadd.xlane.f32.xlu0 %v628
        %v630 = vpop.xlane.xlu0 %629
        %v631 = vsel %vm618, %v606, 0.0
        %632 = vadd.xlane.f32.xlu0 %v631
        %v633 = vpop.xlane.xlu0 %632
        %v634 = vsel %vm618, %v607, 0.0
        %635 = vadd.xlane.f32.xlu0 %v634
        %v636 = vpop.xlane.xlu0 %635
        %v637 = vsel %vm618, %v608, 0.0
        %638 = vadd.xlane.f32.xlu0 %v637
        %v639 = vpop.xlane.xlu0 %638
        %v640 = vsel %vm618, %v609, 0.0
        %641 = vadd.xlane.f32.xlu0 %v640
        %v642 = vpop.xlane.xlu0 %641
        %v643 = vsel %vm618, %v610, 0.0
        %644 = vadd.xlane.f32.xlu0 %v643
        %v645 = vpop.xlane.xlu0 %644
        %v646 = vsel %vm618, %v611, 0.0
        %647 = vadd.xlane.f32.xlu0 %v646
        %v648 = vpop.xlane.xlu0 %647
        %v649 = vsel %vm618, %v612, 0.0
        %650 = vadd.xlane.f32.xlu0 %v649
        %v651 = vpop.xlane.xlu0 %650
        %v652 = vsel %vm618, %v613, 0.0
        %653 = vadd.xlane.f32.xlu0 %v652
        %v654 = vpop.xlane.xlu0 %653
        %v655 = vsel %vm618, %v614, 0.0
        %656 = vadd.xlane.f32.xlu0 %v655
        %v657 = vpop.xlane.xlu0 %656
        %v658 = vsel %vm618, %v615, 0.0
        %659 = vadd.xlane.f32.xlu0 %v658
        %v660 = vpop.xlane.xlu0 %659
        %v661 = vsel %vm618, %v616, 0.0
        %662 = vadd.xlane.f32.xlu0 %v661
        %v663 = vpop.xlane.xlu0 %662
        %v664 = vsel %vm618, %v617, 0.0
        %665 = vadd.xlane.f32.xlu0 %v664
        %v666 = vpop.xlane.xlu0 %665
        %v667 = vmul.f32 %v178, %v178
        %v669 = vcombine.high %v667, %v667
        %vm671 = vcmask 1042432
        %v672 = vsel %vm671, %v667, 0.0
        %v673 = vrot.slane %v672, 4
        %v674 = vadd.f32 %v672, %v673
        %v675 = vrot.slane %v674, 2
        %v676 = vadd.f32 %v674, %v675
        %v677 = vrot.slane %v676, 1
        %v678 = vadd.f32 %v676, %v677
        %v679 = vsel %vm671, %v669, 0.0
        %v680 = vrot.slane %v679, 4
        %v681 = vadd.f32 %v679, %v680
        %v682 = vrot.slane %v681, 2
        %v683 = vadd.f32 %v681, %v682
        %v684 = vrot.slane %v683, 1
        %v685 = vadd.f32 %v683, %v684
        %v686 = vadd.f32 %v621, %v678
        %v687 = vadd.f32 %v621, %v685
        %v688 = vadd.f32 %v624, %v678
        %v689 = vadd.f32 %v624, %v685
        %v690 = vadd.f32 %v627, %v678
        %v691 = vadd.f32 %v627, %v685
        %v692 = vadd.f32 %v630, %v678
        %v693 = vadd.f32 %v630, %v685
        %v694 = vadd.f32 %v633, %v678
        %v695 = vadd.f32 %v633, %v685
        %v696 = vadd.f32 %v636, %v678
        %v697 = vadd.f32 %v636, %v685
        %v698 = vadd.f32 %v639, %v678
        %v699 = vadd.f32 %v639, %v685
        %v700 = vadd.f32 %v642, %v678
        %v701 = vadd.f32 %v642, %v685
        %v702 = vadd.f32 %v645, %v678
        %v703 = vadd.f32 %v645, %v685
        %v704 = vadd.f32 %v648, %v678
        %v705 = vadd.f32 %v648, %v685
        %v706 = vadd.f32 %v651, %v678
        %v707 = vadd.f32 %v651, %v685
        %v708 = vadd.f32 %v654, %v678
        %v709 = vadd.f32 %v654, %v685
        %v710 = vadd.f32 %v657, %v678
        %v711 = vadd.f32 %v657, %v685
        %v712 = vadd.f32 %v660, %v678
        %v713 = vadd.f32 %v660, %v685
        %v714 = vadd.f32 %v663, %v678
        %v715 = vadd.f32 %v663, %v685
        %v716 = vadd.f32 %v666, %v678
        %v717 = vadd.f32 %v666, %v685
        %v718 = vmul.f32 %v570, 2.0
        %v719 = vmul.f32 %v571, 2.0
        %v720 = vmul.f32 %v572, 2.0
        %v721 = vmul.f32 %v573, 2.0
        %v722 = vmul.f32 %v574, 2.0
        %v723 = vmul.f32 %v575, 2.0
        %v724 = vmul.f32 %v576, 2.0
        %v725 = vmul.f32 %v577, 2.0
        %v726 = vmul.f32 %v578, 2.0
        %v727 = vmul.f32 %v579, 2.0
        %v728 = vmul.f32 %v580, 2.0
        %v729 = vmul.f32 %v581, 2.0
        %v730 = vmul.f32 %v582, 2.0
        %v731 = vmul.f32 %v583, 2.0
        %v732 = vmul.f32 %v584, 2.0
        %v733 = vmul.f32 %v585, 2.0
        %v734 = vmul.f32 %v586, 2.0
        %v735 = vmul.f32 %v587, 2.0
        %v736 = vmul.f32 %v588, 2.0
        %v737 = vmul.f32 %v589, 2.0
        %v738 = vmul.f32 %v590, 2.0
        %v739 = vmul.f32 %v591, 2.0
        %v740 = vmul.f32 %v592, 2.0
        %v741 = vmul.f32 %v593, 2.0
        %v742 = vmul.f32 %v594, 2.0
        %v743 = vmul.f32 %v595, 2.0
        %v744 = vmul.f32 %v596, 2.0
        %v745 = vmul.f32 %v597, 2.0
        %v746 = vmul.f32 %v598, 2.0
        %v747 = vmul.f32 %v599, 2.0
        %v748 = vmul.f32 %v600, 2.0
        %v749 = vmul.f32 %v601, 2.0
        %v750 = vsub.f32 %v686, %v718
        %v751 = vsub.f32 %v687, %v719
        %v752 = vsub.f32 %v688, %v720
        %v753 = vsub.f32 %v689, %v721
        %v754 = vsub.f32 %v690, %v722
        %v755 = vsub.f32 %v691, %v723
        %v756 = vsub.f32 %v692, %v724
        %v757 = vsub.f32 %v693, %v725
        %v758 = vsub.f32 %v694, %v726
        %v759 = vsub.f32 %v695, %v727
        %v760 = vsub.f32 %v696, %v728
        %v761 = vsub.f32 %v697, %v729
        %v762 = vsub.f32 %v698, %v730
        %v763 = vsub.f32 %v699, %v731
        %v764 = vsub.f32 %v700, %v732
        %v765 = vsub.f32 %v701, %v733
        %v766 = vsub.f32 %v702, %v734
        %v767 = vsub.f32 %v703, %v735
        %v768 = vsub.f32 %v704, %v736
        %v769 = vsub.f32 %v705, %v737
        %v770 = vsub.f32 %v706, %v738
        %v771 = vsub.f32 %v707, %v739
        %v772 = vsub.f32 %v708, %v740
        %v773 = vsub.f32 %v709, %v741
        %v774 = vsub.f32 %v710, %v742
        %v775 = vsub.f32 %v711, %v743
        %v776 = vsub.f32 %v712, %v744
        %v777 = vsub.f32 %v713, %v745
        %v778 = vsub.f32 %v714, %v746
        %v779 = vsub.f32 %v715, %v747
        %v780 = vsub.f32 %v716, %v748
        %v781 = vsub.f32 %v717, %v749
        %782 = vst [vmem:[%s151] sm:$0xff] %v750
        %783 = vst [vmem:[%s151 + $0x8] sm:$0xff] %v751
        %784 = vst [vmem:[%s151 + $0x10] sm:$0xff] %v752
        %785 = vst [vmem:[%s151 + $0x18] sm:$0xff] %v753
        %786 = vst [vmem:[%s151 + $0x20] sm:$0xff] %v754
        %787 = vst [vmem:[%s151 + $0x28] sm:$0xff] %v755
        %788 = vst [vmem:[%s151 + $0x30] sm:$0xff] %v756
        %789 = vst [vmem:[%s151 + $0x38] sm:$0xff] %v757
        %790 = vst [vmem:[%s151 + $0x40] sm:$0xff] %v758
        %791 = vst [vmem:[%s151 + $0x48] sm:$0xff] %v759
        %792 = vst [vmem:[%s151 + $0x50] sm:$0xff] %v760
        %793 = vst [vmem:[%s151 + $0x58] sm:$0xff] %v761
        %794 = vst [vmem:[%s151 + $0x60] sm:$0xff] %v762
        %795 = vst [vmem:[%s151 + $0x68] sm:$0xff] %v763
        %796 = vst [vmem:[%s151 + $0x70] sm:$0xff] %v764
        %797 = vst [vmem:[%s151 + $0x78] sm:$0xff] %v765
        %798 = vst [vmem:[%s151 + $0x80] sm:$0xff] %v766
        %799 = vst [vmem:[%s151 + $0x88] sm:$0xff] %v767
        %800 = vst [vmem:[%s151 + $0x90] sm:$0xff] %v768
        %801 = vst [vmem:[%s151 + $0x98] sm:$0xff] %v769
        %802 = vst [vmem:[%s151 + $0xa0] sm:$0xff] %v770
        %803 = vst [vmem:[%s151 + $0xa8] sm:$0xff] %v771
        %804 = vst [vmem:[%s151 + $0xb0] sm:$0xff] %v772
        %805 = vst [vmem:[%s151 + $0xb8] sm:$0xff] %v773
        %806 = vst [vmem:[%s151 + $0xc0] sm:$0xff] %v774
        %807 = vst [vmem:[%s151 + $0xc8] sm:$0xff] %v775
        %808 = vst [vmem:[%s151 + $0xd0] sm:$0xff] %v776
        %809 = vst [vmem:[%s151 + $0xd8] sm:$0xff] %v777
        %810 = vst [vmem:[%s151 + $0xe0] sm:$0xff] %v778
        %811 = vst [vmem:[%s151 + $0xe8] sm:$0xff] %v779
        %812 = vst [vmem:[%s151 + $0xf0] sm:$0xff] %v780
        %813 = vst [vmem:[%s151 + $0xf8] sm:$0xff] %v781
        %s814 = sand.u32 %s76, 1
        %s815 = scalar_lea.sflag [#allocation3], %s814
        %s816 = sand.u32 %s76, 1
        %s817 = smul.addr %s816, 256
        %s818 = scalar_lea.vmem [#allocation2], %s817
        // Predicated region
        $region29: #{tpu_custom_call.1} parent=27 // pred_check
          %p819 = pneg %p86
        $region30: #{tpu_custom_call.1} parent=27 // pred_check_branch
          %821 = sbr.rel (%p819) target = $region32
        $region31: #{tpu_custom_call.1} parent=27 // pred_region
          %s823 = ssub.s32 4096, 4096
          %824 = vsyncadd %s815, %s823
          %s825 = smul.addr %s16, 32
          %s826 = smul.addr %s825, 128
          %s827 = scalar_lea.hbm %s2, %s826
          %s828 = sshll.u32 %s818, 4
          %s829 = int_to_ptr.vmem [resolvable:$true] %s828
          %834 = dma.vmem_to_hbm [thread:$0]  %s829, 4096, %s827, %s815, 256, 256, 16
        $region32: #{tpu_custom_call.1} parent=27 // pred_fallthru
          _
      $region28: #{tpu_custom_call.1} parent=5 // pred_fallthru
        _
      %p835 = scmp.le.s32.totalorder 2, %s11
      // Predicated region
      $region33: #{tpu_custom_call.1} parent=5 // pred_check
        %p836 = pneg %p835
      $region34: #{tpu_custom_call.1} parent=5 // pred_check_branch
        %838 = sbr.rel (%p836) target = $region36
      $region35: #{tpu_custom_call.1} parent=5 // pred_region
        %s839 = ssub.s32 %s11, 2
        // Predicated region
        $region37: #{tpu_custom_call.1} parent=35 // pred_check
          %p840 = pneg %p92
        $region38: #{tpu_custom_call.1} parent=35 // pred_check_branch
          %842 = sbr.rel (%p840) target = $region40
        $region39: #{tpu_custom_call.1} parent=35 // pred_region
          %s843 = sand.u32 %s77, 1
          %s844 = scalar_lea.sflag [#allocation3], %s843
          %s845 = sand.u32 %s77, 1
          %s846 = smul.addr %s845, 256
          %s847 = scalar_lea.vmem [#allocation2], %s846
          %848 = dma.done %s844, 4096
        $region40: #{tpu_custom_call.1} parent=35 // pred_fallthru
          _
      $region36: #{tpu_custom_call.1} parent=5 // pred_fallthru
        _
    $region6: #{tpu_custom_call.1} parent=1 // loop_footer
      %s15 = sadd.s32 1, %s11
    $region7: #{tpu_custom_call.1} parent=1 // loop_footer_branch
      %10 = sbr.rel target = $region3
    $region8: #{tpu_custom_call.1} parent=1 // loop_exit
      _
    %849 = vsyncpa [#allocation3], 1
    %s850 = scalar_lea.sflag [#allocation3], 1
    %851 = vsyncpa %s850, 1

</llo_original>
